<compile_context>
chip_gen: v5e
topology: v5e:2x2
jax: 0.10.0
libtpu: 0.0.40
codegen_flags: <defaults>
</compile_context>

<pallas_src>
import jax
import jax.numpy as jnp
from jax.experimental import pallas as pl
from jax.experimental.pallas import tpu as pltpu


_SUBLANE = 8  # f32-safe sublane multiple for the batch (second-last) dim


def _round_up(x, m):
    return ((x + m - 1) // m) * m


def _movie_rho_kernel(x_ref, w1_ref, b1_ref, w2_ref, b2_ref, o_ref):
    # Cast x f32 -> bf16 in-kernel (VPU, hidden under the tile DMA).
    x = x_ref[...].astype(jnp.bfloat16)
    # fc1 on the MXU: bf16 operands, f32 accumulation.
    h = jnp.dot(x, w1_ref[...], preferred_element_type=jnp.float32)
    # bias + tanh in f32 (VPU + EUP).
    h = jnp.tanh(h + b1_ref[...])
    # fc2 on the MXU (tanh output downcast to bf16 for the second matmul).
    out = jnp.dot(h.astype(jnp.bfloat16), w2_ref[...],
                  preferred_element_type=jnp.float32)
    o_ref[...] = (out + b2_ref[...]).astype(o_ref.dtype)


def _choose_block_b(batch):
    """Adaptive batch tile:
       - batch <= 1024 rows: one grid step (overhead-bound regime; no split).
       - larger batches: ~1-2K rows/step, always a multiple of 8, and capped so
         there are >= 2 grid steps (keeps both v7x TensorCores busy)."""
    b8 = _round_up(batch, _SUBLANE)
    if b8 <= 1024:
        return b8
    target = 2048 if b8 >= 4096 else 1024
    half = _round_up(pl.cdiv(b8, 2), _SUBLANE)   # guarantees >= 2 blocks
    return max(_SUBLANE, min(target, half))


def movie_rho_forward(x, w1, b1, w2, b2, *, block_b=None):
    """Fused fc1 -> tanh -> fc2.

    x : (B, D) float32
    w1: (D, D), b1: (1, D) or (D,)
    w2: (D, O), b2: (1, O) or (O,)
    Weights are stored (in, out) == transpose of PyTorch nn.Linear's (out, in).
    """
    B, D = x.shape
    O = w2.shape[1]

    if block_b is None:
        block_b = _choose_block_b(B)
    assert block_b == B or block_b % _SUBLANE == 0, \
        "block_b must be a multiple of 8 (sublane) or equal the full batch"

    n_blocks = pl.cdiv(B, block_b)

    # Weights are tiny (64x64, 64x16); bf16-cast them wrapper-side once per call.
    # TODO(synk): in production, pre-pack weights as bf16 outside the hot path.
    w1_p = w1.astype(jnp.bfloat16)
    b1_p = jnp.reshape(b1, (1, D)).astype(jnp.float32)
    w2_p = w2.astype(jnp.bfloat16)
    b2_p = jnp.reshape(b2, (1, O)).astype(jnp.float32)

    cost = pl.CostEstimate(
        flops=2 * B * D * (D + O),
        transcendentals=B * D,  # tanh
        bytes_accessed=(x.size * 4              # x read as f32
                        + w1_p.size * 2 + w2_p.size * 2
                        + b1_p.size * 4 + b2_p.size * 4
                        + B * O * 4),           # unpadded f32 output
    )

    resident = pl.Buffered(1)  # weights/biases never change across grid steps

    out = pl.pallas_call(
        _movie_rho_kernel,
        out_shape=jax.ShapeDtypeStruct((B, O), x.dtype),
        grid_spec=pltpu.PrefetchScalarGridSpec(
            num_scalar_prefetch=0,
            grid=(n_blocks,),
            in_specs=[
                pl.BlockSpec((block_b, D), lambda i: (i, 0)),   # x tile (pipelined)
                pl.BlockSpec((D, D), lambda i: (0, 0),
                             pipeline_mode=resident),           # W1 (resident)
                pl.BlockSpec((1, D), lambda i: (0, 0),
                             pipeline_mode=resident),           # b1
                pl.BlockSpec((D, O), lambda i: (0, 0),
                             pipeline_mode=resident),           # W2 (resident)
                pl.BlockSpec((1, O), lambda i: (0, 0),
                             pipeline_mode=resident),           # b2
            ],
            out_specs=pl.BlockSpec((block_b, O), lambda i: (i, 0)),
        ),
        compiler_params=pltpu.CompilerParams(
            dimension_semantics=("parallel",)),  # batch tiles shard across TCs (v7x)
        cost_estimate=cost,
    )(x, w1_p, b1_p, w2_p, b2_p)

    return out


def _ref_forward(x, w1, b1, w2, b2):
    """Pure-JAX reference of the same (bf16-operand, f32-accumulate) math."""
    h = jnp.dot(x.astype(jnp.bfloat16), w1.astype(jnp.bfloat16),
                preferred_element_type=jnp.float32)
    h = jnp.tanh(h + jnp.reshape(b1, (1, -1)).astype(jnp.float32))
    out = jnp.dot(h.astype(jnp.bfloat16), w2.astype(jnp.bfloat16),
                  preferred_element_type=jnp.float32)
    return (out + jnp.reshape(b2, (1, -1)).astype(jnp.float32)).astype(x.dtype)


def init_params(key, input_dim=64, output_dim=16, dtype=jnp.float32):
    # nn.Linear default init: U(-1/sqrt(fan_in), 1/sqrt(fan_in)); fan_in=input_dim.
    k1, k2, k3, k4 = jax.random.split(key, 4)
    bound = 1.0 / jnp.sqrt(input_dim)
    # stored as (in, out) == transpose of PyTorch's (out, in)
    w1 = jax.random.uniform(k1, (input_dim, input_dim), dtype, -bound, bound)
    b1 = jax.random.uniform(k2, (1, input_dim), dtype, -bound, bound)
    w2 = jax.random.uniform(k3, (input_dim, output_dim), dtype, -bound, bound)
    b2 = jax.random.uniform(k4, (1, output_dim), dtype, -bound, bound)
    return w1, b1, w2, b2


if __name__ == "__main__":
    input_dim, output_dim = 64, 16
    key = jax.random.PRNGKey(0)
    kx, kx2, kp = jax.random.split(key, 3)
    w1, b1, w2, b2 = init_params(kp, input_dim, output_dim)

    # Small batch (matches the module's natural scale): single grid step,
    # no wrapper pad/cast/slice passes at all.
    batch = 8
    x = jax.random.normal(kx, (batch, input_dim), jnp.float32)
    out = jax.block_until_ready(movie_rho_forward(x, w1, b1, w2, b2))
    assert out.shape == (batch, output_dim)
    ref = _ref_forward(x, w1, b1, w2, b2)
    assert jnp.allclose(out, ref, atol=1e-2, rtol=1e-2)
    # Sanity vs full-f32 PyTorch-equivalent math (loose: bf16 MXU operands).
    ref_f32 = jnp.tanh(x @ w1 + b1) @ w2 + b2
    assert jnp.allclose(out, ref_f32, atol=0.1, rtol=0.1)

    # Larger, non-divisible batch: exercises the multi-step grid (pipelining /
    # megacore path) and Pallas ragged-last-block masking with no wrapper pad.
    batch2 = 1300
    x2 = jax.random.normal(kx2, (batch2, input_dim), jnp.float32)
    out2 = jax.block_until_ready(movie_rho_forward(x2, w1, b1, w2, b2))
    assert out2.shape == (batch2, output_dim)
    ref2 = _ref_forward(x2, w1, b1, w2, b2)
    assert jnp.allclose(out2, ref2, atol=1e-2, rtol=1e-2)

    print("KERNEL_OK")
</pallas_src>

<mosaic_0001>
module attributes {stable_mosaic.version = 11 : i64} {
  func.func @_movie_rho_kernel(%arg0: i32, %arg1: memref<8x64xf32, #tpu.memory_space<vmem>>, %arg2: memref<64x64xbf16, #tpu.memory_space<vmem>>, %arg3: memref<1x64xf32, #tpu.memory_space<vmem>>, %arg4: memref<64x16xbf16, #tpu.memory_space<vmem>>, %arg5: memref<1x16xf32, #tpu.memory_space<vmem>>, %arg6: memref<8x16xf32, #tpu.memory_space<vmem>>) attributes {dimension_semantics = [#tpu.dimension_semantics<parallel>], iteration_bounds = array<i64: 1>, scalar_prefetch = 0 : i64, scratch_operands = 0 : i64, tpu.core_type = #tpu.core_type<tc>, window_params = [{transform_indices = @transform_0, window_bounds = array<i64: 8, 64>}, {pipeline_mode = #tpu.pipeline_mode<synchronous>, transform_indices = @transform_1, window_bounds = array<i64: 64, 64>}, {pipeline_mode = #tpu.pipeline_mode<synchronous>, transform_indices = @transform_2, window_bounds = array<i64: 1, 64>}, {pipeline_mode = #tpu.pipeline_mode<synchronous>, transform_indices = @transform_3, window_bounds = array<i64: 64, 16>}, {pipeline_mode = #tpu.pipeline_mode<synchronous>, transform_indices = @transform_4, window_bounds = array<i64: 1, 16>}, {transform_indices = @transform_5, window_bounds = array<i64: 8, 16>}]} {
    %c0 = arith.constant 0 : index
    %c0_0 = arith.constant 0 : index
    %0 = vector.load %arg1[%c0, %c0_0] : memref<8x64xf32, #tpu.memory_space<vmem>>, vector<8x64xf32>
    %1 = arith.truncf %0 : vector<8x64xf32> to vector<8x64xbf16>
    %c0_1 = arith.constant 0 : index
    %c0_2 = arith.constant 0 : index
    %2 = vector.load %arg2[%c0_1, %c0_2] : memref<64x64xbf16, #tpu.memory_space<vmem>>, vector<64x64xbf16>
    %cst = arith.constant dense<0.000000e+00> : vector<8x64xf32>
    %3 = tpu.matmul %1, %2, %cst {dimension_numbers = #tpu.dot_dimension_numbers<[1], [0], [0], [1], [0, 0, 1, 1], [], []>} : vector<8x64xbf16>, vector<64x64xbf16>, vector<8x64xf32> -> vector<8x64xf32>
    %c0_3 = arith.constant 0 : index
    %c0_4 = arith.constant 0 : index
    %4 = vector.load %arg3[%c0_3, %c0_4] : memref<1x64xf32, #tpu.memory_space<vmem>>, vector<1x64xf32>
    %5 = vector.broadcast %4 : vector<1x64xf32> to vector<8x64xf32>
    %6 = arith.addf %3, %5 : vector<8x64xf32>
    %7 = math.tanh %6 : vector<8x64xf32>
    %8 = arith.truncf %7 : vector<8x64xf32> to vector<8x64xbf16>
    %c0_5 = arith.constant 0 : index
    %c0_6 = arith.constant 0 : index
    %9 = vector.load %arg4[%c0_5, %c0_6] : memref<64x16xbf16, #tpu.memory_space<vmem>>, vector<64x16xbf16>
    %cst_7 = arith.constant dense<0.000000e+00> : vector<8x16xf32>
    %10 = tpu.matmul %8, %9, %cst_7 {dimension_numbers = #tpu.dot_dimension_numbers<[1], [0], [0], [1], [0, 0, 1, 1], [], []>} : vector<8x64xbf16>, vector<64x16xbf16>, vector<8x16xf32> -> vector<8x16xf32>
    %c0_8 = arith.constant 0 : index
    %c0_9 = arith.constant 0 : index
    %11 = vector.load %arg5[%c0_8, %c0_9] : memref<1x16xf32, #tpu.memory_space<vmem>>, vector<1x16xf32>
    %12 = vector.broadcast %11 : vector<1x16xf32> to vector<8x16xf32>
    %13 = arith.addf %10, %12 : vector<8x16xf32>
    %c0_10 = arith.constant 0 : index
    %c0_11 = arith.constant 0 : index
    %14 = vector.load %arg6[%c0_10, %c0_11] : memref<8x16xf32, #tpu.memory_space<vmem>>, vector<8x16xf32>
    tpu.vector_store %arg6[%c0_10, %c0_11], %13 {strides = array<i32>} : memref<8x16xf32, #tpu.memory_space<vmem>>, vector<8x16xf32>,
    return
  }
  func.func @transform_0(%arg0: i32) -> (i32, i32) {
    %c0_i32 = arith.constant 0 : i32
    %c0_i32_0 = arith.constant 0 : i32
    return %arg0, %c0_i32 : i32, i32
  }
  func.func @transform_1(%arg0: i32) -> (i32, i32) {
    %c0_i32 = arith.constant 0 : i32
    %c0_i32_0 = arith.constant 0 : i32
    %c0_i32_1 = arith.constant 0 : i32
    return %c0_i32, %c0_i32_0 : i32, i32
  }
  func.func @transform_2(%arg0: i32) -> (i32, i32) {
    %c0_i32 = arith.constant 0 : i32
    %c0_i32_0 = arith.constant 0 : i32
    %c0_i32_1 = arith.constant 0 : i32
    return %c0_i32, %c0_i32_0 : i32, i32
  }
  func.func @transform_3(%arg0: i32) -> (i32, i32) {
    %c0_i32 = arith.constant 0 : i32
    %c0_i32_0 = arith.constant 0 : i32
    %c0_i32_1 = arith.constant 0 : i32
    return %c0_i32, %c0_i32_0 : i32, i32
  }
  func.func @transform_4(%arg0: i32) -> (i32, i32) {
    %c0_i32 = arith.constant 0 : i32
    %c0_i32_0 = arith.constant 0 : i32
    %c0_i32_1 = arith.constant 0 : i32
    return %c0_i32, %c0_i32_0 : i32, i32
  }
  func.func @transform_5(%arg0: i32) -> (i32, i32) {
    %c0_i32 = arith.constant 0 : i32
    %c0_i32_0 = arith.constant 0 : i32
    return %arg0, %c0_i32 : i32, i32
  }
}

</mosaic_0001>

<llo_original>
// kernel: tpu_custom_call.1
$region0: #{tpu_custom_call.1}
  #allocation0 [shape = 'u32[]', space=smem, size = 0x4, offset = 0x4, fixed_abs, tag = 'smem constant byte address 0x4 - core index']
  #allocation1 [shape = 'u32[72,128]{1,0:T(1,128)}', space=vmem, size = 0x9000, scoped, tag = 'internal scratch']
  %s0 = inlined_call_operand.vmem [shape: f32[8,64], index: 0, kind: input, shape index: {}]
  %s1 = inlined_call_operand.vmem [shape: bf16[64,64], index: 1, kind: input, shape index: {}]
  %s2 = inlined_call_operand.vmem [shape: f32[1,64], index: 2, kind: input, shape index: {}]
  %s3 = inlined_call_operand.vmem [shape: bf16[64,16], index: 3, kind: input, shape index: {}]
  %s4 = inlined_call_operand.vmem [shape: f32[1,16], index: 4, kind: input, shape index: {}]
  %s5 = inlined_call_operand.hbm [shape: f32[8,16], index: 5, kind: output, shape index: {}]
  %s6 = sld [smem:[#allocation0]]
  $region30: #{tpu_custom_call.1} parent=0
    _
  %s8 = ssub.s32 1, %s6
  %s9 = scalar_select 0, %s8, %s6
  $region1: #{tpu_custom_call.1} parent=0
    #allocation2 [shape = 'u8[4096]{0}', space=vmem, size = 0x1000, scoped, tag = 'output window, operand 0, single buffered']
    #allocation3 [shape = 's32[1]{0}', space=sflag, size = 0x4, scoped, tag = 'scoped memory for tpu_custom_call.1']
    %10 = vsyncpa [#allocation3], 0
    // Predicated region
    $region2: #{tpu_custom_call.1} parent=1 // pred_check
      _
    $region3: #{tpu_custom_call.1} parent=1 // pred_check_branch
      %12 = sbr.rel (0) target = $region5
    $region4: #{tpu_custom_call.1} parent=1 // pred_region
      _
    $region5: #{tpu_custom_call.1} parent=1 // pred_fallthru
      _
    // Predicated region
    $region6: #{tpu_custom_call.1} parent=1 // pred_check
      _
    $region7: #{tpu_custom_call.1} parent=1 // pred_check_branch
      %14 = sbr.rel (0) target = $region9
    $region8: #{tpu_custom_call.1} parent=1 // pred_region
      _
    $region9: #{tpu_custom_call.1} parent=1 // pred_fallthru
      _
    // Predicated region
    $region10: #{tpu_custom_call.1} parent=1 // pred_check
      _
    $region11: #{tpu_custom_call.1} parent=1 // pred_check_branch
      %16 = sbr.rel (0) target = $region13
    $region12: #{tpu_custom_call.1} parent=1 // pred_region
      _
    $region13: #{tpu_custom_call.1} parent=1 // pred_fallthru
      _
    // Predicated region
    $region14: #{tpu_custom_call.1} parent=1 // pred_check
      _
    $region15: #{tpu_custom_call.1} parent=1 // pred_check_branch
      %18 = sbr.rel (0) target = $region17
    $region16: #{tpu_custom_call.1} parent=1 // pred_region
      _
    $region17: #{tpu_custom_call.1} parent=1 // pred_fallthru
      _
    // Predicated region
    $region18: #{tpu_custom_call.1} parent=1 // pred_check
      _
    $region19: #{tpu_custom_call.1} parent=1 // pred_check_branch
      %20 = sbr.rel (0) target = $region21
    $region20: #{tpu_custom_call.1} parent=1 // pred_region
      _
    $region21: #{tpu_custom_call.1} parent=1 // pred_fallthru
      _
    %v22 = vld [vmem:[%s0] sm:$0xff]
    %v23 = vpack.c.bf16 %v22, %v22
    %v24 = vld [vmem:[%s1] sm:$0xf]
    %v25 = vld [vmem:[%s1 + $0x4] sm:$0xf]
    %v26 = vld [vmem:[%s1 + $0x8] sm:$0xf]
    %v27 = vld [vmem:[%s1 + $0xc] sm:$0xf]
    %v28 = vld [vmem:[%s1 + $0x10] sm:$0xf]
    %v29 = vld [vmem:[%s1 + $0x14] sm:$0xf]
    %v30 = vld [vmem:[%s1 + $0x18] sm:$0xf]
    %v31 = vld [vmem:[%s1 + $0x1c] sm:$0xf]
    %v32 = vld [vmem:[%s2] sm:$0x1]
    %v34 = vperm.slane %v32, 0
    %v44 = vunpack.c.l.b16 %v24
    %v45 = vunpack.c.l.b16 %v25
    %v46 = vunpack.c.l.b16 %v26
    %v47 = vunpack.c.l.b16 %v27
    %v48 = vunpack.c.l.b16 %v28
    %v49 = vunpack.c.l.b16 %v29
    %v50 = vunpack.c.l.b16 %v30
    %v51 = vunpack.c.l.b16 %v31
    %v52 = vpack.c.b16 %v45, %v44
    %v53 = vpack.c.b16 %v47, %v46
    %v54 = vpack.c.b16 %v49, %v48
    %v55 = vpack.c.b16 %v51, %v50
    %vm60 = vcmask 523264
    %v62 = vsel %vm60, %v23, 0
    %64 = vmatpush.bf16.msra.mxu0 0
    %65 = vmatpush.bf16.msra.mxu0 0
    %66 = vmatpush.bf16.msra.mxu0 0
    %67 = vmatpush.bf16.msra.mxu0 0
    %68 = vmatpush.bf16.msra.mxu0 %v55
    %69 = vmatpush.bf16.msra.mxu0 %v54
    %70 = vmatpush.bf16.msra.mxu0 %v53
    %71 = vmatpush.bf16.msra.mxu0 %v52
    %72 = vmatmul.bf16.gmra.mxu0 %v62
    %v73 = vpop.f32.mrf.mxu0
    %v74 = vadd.f32 %v34, %v73
    %v75 = vpop.f32.mrf.mxu0
    %76 = vdwg.mxu0
    %v77 = vtanh.pop %v74
    %v78 = vpack.c.bf16 %v77, %v77
    %v79 = vld [vmem:[%s3] sm:$0xf]
    %v80 = vld [vmem:[%s3 + $0x4] sm:$0xf]
    %v81 = vld [vmem:[%s3 + $0x8] sm:$0xf]
    %v82 = vld [vmem:[%s3 + $0xc] sm:$0xf]
    %v83 = vld [vmem:[%s3 + $0x10] sm:$0xf]
    %v84 = vld [vmem:[%s3 + $0x14] sm:$0xf]
    %v85 = vld [vmem:[%s3 + $0x18] sm:$0xf]
    %v86 = vld [vmem:[%s3 + $0x1c] sm:$0xf]
    %v87 = vld [vmem:[%s4] sm:$0x1]
    %v89 = vperm.slane %v87, 0
    %v99 = vunpack.c.l.b16 %v79
    %v100 = vunpack.c.l.b16 %v80
    %v101 = vunpack.c.l.b16 %v81
    %v102 = vunpack.c.l.b16 %v82
    %v103 = vunpack.c.l.b16 %v83
    %v104 = vunpack.c.l.b16 %v84
    %v105 = vunpack.c.l.b16 %v85
    %v106 = vunpack.c.l.b16 %v86
    %v107 = vpack.c.b16 %v100, %v99
    %v108 = vpack.c.b16 %v102, %v101
    %v109 = vpack.c.b16 %v104, %v103
    %v110 = vpack.c.b16 %v106, %v105
    %v116 = vsel %vm60, %v78, 0
    %118 = vmatpush.bf16.msra.mxu0 0
    %119 = vmatpush.bf16.msra.mxu0 0
    %120 = vmatpush.bf16.msra.mxu0 0
    %121 = vmatpush.bf16.msra.mxu0 0
    %122 = vmatpush.bf16.msra.mxu0 %v110
    %123 = vmatpush.bf16.msra.mxu0 %v109
    %124 = vmatpush.bf16.msra.mxu0 %v108
    %125 = vmatpush.bf16.msra.mxu0 %v107
    %126 = vmatmul.bf16.gmra.mxu0 %v116
    %v127 = vpop.f32.mrf.mxu0
    %v128 = vadd.f32 %v89, %v127
    %v129 = vpop.f32.mrf.mxu0
    %130 = vdwg.mxu0
    %vm131 = vcmask 130048
    %132 = vst.msk [vmem:[#allocation2] sm:$0xff] %vm131, %v128
    // Predicated region
    $region22: #{tpu_custom_call.1} parent=1 // pred_check
      _
    $region23: #{tpu_custom_call.1} parent=1 // pred_check_branch
      %134 = sbr.rel (0) target = $region25
    $region24: #{tpu_custom_call.1} parent=1 // pred_region
      %136 = vsyncadd [#allocation3], 0
      %s138 = sshll.u32 [#allocation2], 4
      %s139 = int_to_ptr.vmem [resolvable:$true] %s138
      %s140 = sshll.u32 %s5, 4
      %s141 = int_to_ptr.hbm [resolvable:$true] %s140
      %143 = dma.vmem_to_hbm [thread:$0]  %s139, 128, %s141, [#allocation3]
    $region25: #{tpu_custom_call.1} parent=1 // pred_fallthru
      _
    // Predicated region
    $region26: #{tpu_custom_call.1} parent=1 // pred_check
      _
    $region27: #{tpu_custom_call.1} parent=1 // pred_check_branch
      %145 = sbr.rel (0) target = $region29
    $region28: #{tpu_custom_call.1} parent=1 // pred_region
      %147 = dma.done [#allocation3], 128
    $region29: #{tpu_custom_call.1} parent=1 // pred_fallthru
      _
    %148 = vsyncpa [#allocation3], 1

</llo_original>
